<compile_context>
chip_gen: v7x
topology: tpu7x:2x2x1
jax: 0.10.0
libtpu: 0.0.40
codegen_flags: <defaults>
</compile_context>

<pallas_src>
import functools

import jax
import jax.numpy as jnp
from jax.experimental import pallas as pl
from jax.experimental.pallas import tpu as pltpu


_MIN_SPLIT_ROWS = 512  # don't split the batch below this (per-step overhead ~0.35 us)


def _qu_ensemble_kernel(x_ref, w1_ref, b1_ref, w2_ref, b2_ref, w3_ref, b3_ref,
                        out_ref):
    """Whole ensemble for one batch tile.

    x:   [tb, D]       bf16   (obs and act already fused upstream)
    w1:  [D, E*H]      bf16   (per-ensemble column blocks packed side by side)
    w2:  [E*H, E*H]    bf16   (block-diagonal)
    w3:  [E*H, E*QU]   bf16   (block-diagonal)
    b*:  f32 rows, broadcast over the batch tile
    out: [tb, E*QU]    f32    (lane-dense slab; split/permute is JAX glue)
    """
    # Layer 1: single K=D matmul, f32 accumulation.
    h1 = jnp.dot(x_ref[...], w1_ref[...], preferred_element_type=jnp.float32)
    h1 = jnp.maximum(h1 + b1_ref[...], 0.0)                       # [tb, E*H]

    # Layer 2: block-diagonal -> one lane-dense matmul (one MXU tile at E*H=128).
    h2 = jnp.dot(h1.astype(w2_ref.dtype), w2_ref[...],
                 preferred_element_type=jnp.float32)
    h2 = jnp.maximum(h2 + b2_ref[...], 0.0)                       # [tb, E*H]

    # Layer 3: block-diagonal output head.
    y = jnp.dot(h2.astype(w3_ref.dtype), w3_ref[...],
                preferred_element_type=jnp.float32)
    # TODO(synk): if profiling on v5e shows the 8-lane masked stores binding at
    # large tb, emit the output transposed ([E*QU, tb]) and permute in JAX.
    out_ref[...] = (y + b3_ref[...]).astype(out_ref.dtype)        # [tb, E*QU]


def pack_params(params, *, weight_dtype=jnp.bfloat16):
    """Pack stacked per-ensemble weights into lane-dense / block-diagonal form.

    Done ONCE at init / param-update time, not per forward call.
    """
    E, D, H = params["w1"].shape
    QU = params["w3"].shape[-1]
    # TODO(synk): switch to a per-ensemble grid/loop over diagonal [H,H] blocks
    # once E*H > MXU tile width; block-diag wastes E x FLOPs and (E*H)^2 memory there.

    # [E, D, H] -> [D, E*H]  (column block e == W1_e)
    w1 = jnp.transpose(params["w1"], (1, 0, 2)).reshape(D, E * H)
    # Block-diagonal layers 2/3 (exact zeros off-diagonal -> no cross-ensemble leakage).
    w2 = jax.scipy.linalg.block_diag(*[params["w2"][e] for e in range(E)])   # [E*H, E*H]
    w3 = jax.scipy.linalg.block_diag(*[params["w3"][e] for e in range(E)])   # [E*H, E*QU]

    return {
        "w1": w1.astype(weight_dtype),
        "b1": params["b1"].reshape(1, E * H).astype(jnp.float32),
        "w2": w2.astype(weight_dtype),
        "b2": params["b2"].reshape(1, E * H).astype(jnp.float32),
        "w3": w3.astype(weight_dtype),
        "b3": params["b3"].reshape(1, E * QU).astype(jnp.float32),
        "E": E, "H": H, "QU": QU, "D": D,
    }


def _batch_tiling(batch, block_b):
    """Pick (tile_rows, padded_rows) with padded % tile == 0 and tile % 8 == 0.

    For batches large enough to be worth splitting, guarantees an even number
    (>= 2) of tiles so the 'parallel' grid axis feeds both v7x TensorCores.
    """
    rows = max(8, ((batch + 7) // 8) * 8)            # sublane-aligned
    if rows <= block_b:
        if rows >= 2 * _MIN_SPLIT_ROWS:              # worth splitting across TCs
            tile = ((rows // 2 + 7) // 8) * 8
            return tile, 2 * tile
        return rows, rows                            # single tile (small batch)
    tile = block_b
    n_tiles = (rows + tile - 1) // tile
    if n_tiles % 2:                                  # even tile count balances v7x
        n_tiles += 1
    return tile, n_tiles * tile


@functools.partial(jax.jit, static_argnames=("num_ensemble", "q_u", "block_b"))
def _forward_impl(obs, act, w1, b1, w2, b2, w3, b3, *,
                  num_ensemble, q_u, block_b):
    B = obs.shape[0]
    D = obs.shape[1] + act.shape[1]
    EH = w2.shape[0]
    EQU = w3.shape[1]

    # Fuse obs/act into one K=D input (single layer-1 MXU pass, single input
    # stream) and cast to the weight dtype so input DMA is halved too.
    x = jnp.concatenate([obs, act], axis=-1).astype(w1.dtype)

    tb, b_pad = _batch_tiling(B, block_b)
    if b_pad != B:
        x = jnp.pad(x, ((0, b_pad - B), (0, 0)))     # padded rows sliced off below

    out = pl.pallas_call(
        _qu_ensemble_kernel,
        out_shape=jax.ShapeDtypeStruct((b_pad, EQU), jnp.float32),
        grid_spec=pltpu.PrefetchScalarGridSpec(
            num_scalar_prefetch=0,
            grid=(b_pad // tb,),
            in_specs=[
                pl.BlockSpec((tb, D), lambda i: (i, 0)),     # [obs|act] batch tile
                # Constant-index weights/biases stay VMEM-resident across the
                # batch grid (Pallas only re-DMAs when the block index changes).
                pl.BlockSpec((D, EH),   lambda i: (0, 0)),   # packed W1
                pl.BlockSpec((1, EH),   lambda i: (0, 0)),   # b1
                pl.BlockSpec((EH, EH),  lambda i: (0, 0)),   # block-diag W2
                pl.BlockSpec((1, EH),   lambda i: (0, 0)),   # b2
                pl.BlockSpec((EH, EQU), lambda i: (0, 0)),   # block-diag W3
                pl.BlockSpec((1, EQU),  lambda i: (0, 0)),   # b3
            ],
            out_specs=pl.BlockSpec((tb, EQU), lambda i: (i, 0)),  # lane-dense slab
        ),
        compiler_params=pltpu.CompilerParams(
            dimension_semantics=("parallel",),          # batch tiles -> both TCs on v7x
            vmem_limit_bytes=48 * 1024 * 1024,          # above 16/32 MiB defaults, below v7x physical
        ),
    )(x, w1, b1, w2, b2, w3, b3)

    out = out[:B]
    # [B, E*QU] -> [B, E, QU] -> [QU, B, E]   (pure layout glue, outside the kernel)
    return jnp.transpose(out.reshape(B, num_ensemble, q_u), (2, 0, 1))


def qu_ensemble_forward(obs, act, packed, *, block_b=2048):
    """Ensemble forward.

    Args:
      obs: [B, obs_dim] float32
      act: [B, act_dim] float32
      packed: output of pack_params()

    Returns:
      [q_u, B, E] float32  (matches torch.stack([f(obs, act) ...], dim=-1))
    """
    return _forward_impl(obs, act,
                         packed["w1"], packed["b1"],
                         packed["w2"], packed["b2"],
                         packed["w3"], packed["b3"],
                         num_ensemble=packed["E"], q_u=packed["QU"],
                         block_b=block_b)


def init_params(key, obs_dim, act_dim, hidden, num_ensemble, q_u=2):
    """Deterministic synthetic parameter init (stacked over the ensemble)."""
    D = obs_dim + act_dim
    ks = jax.random.split(key, 6)
    scale1 = 1.0 / jnp.sqrt(D)
    scale2 = 1.0 / jnp.sqrt(hidden)
    return {
        "w1": jax.random.normal(ks[0], (num_ensemble, D, hidden), jnp.float32) * scale1,
        "b1": jax.random.normal(ks[1], (num_ensemble, hidden), jnp.float32) * 0.01,
        "w2": jax.random.normal(ks[2], (num_ensemble, hidden, hidden), jnp.float32) * scale2,
        "b2": jax.random.normal(ks[3], (num_ensemble, hidden), jnp.float32) * 0.01,
        "w3": jax.random.normal(ks[4], (num_ensemble, hidden, q_u), jnp.float32) * scale2,
        "b3": jax.random.normal(ks[5], (num_ensemble, q_u), jnp.float32) * 0.01,
    }


def _reference_forward(obs, act, params):
    """Pure-JAX f32 reference (semantics of the PyTorch ensemble)."""
    x = jnp.concatenate([obs, act], axis=-1)
    outs = []
    E = params["w1"].shape[0]
    for e in range(E):
        h = jnp.maximum(x @ params["w1"][e] + params["b1"][e], 0.0)
        h = jnp.maximum(h @ params["w2"][e] + params["b2"][e], 0.0)
        y = h @ params["w3"][e] + params["b3"][e]      # [B, 2]
        outs.append(y.T)                               # [2, B] per network
    return jnp.stack(outs, axis=-1)                    # [2, B, E]


if __name__ == "__main__":
    key = jax.random.PRNGKey(0)
    k_obs, k_act, k_p = jax.random.split(key, 3)

    B, obs_dim, act_dim, hidden, num_ensemble = 8, 12, 4, 32, 4

    obs = jax.random.normal(k_obs, (B, obs_dim), jnp.float32)
    act = jax.random.normal(k_act, (B, act_dim), jnp.float32)
    params = init_params(k_p, obs_dim, act_dim, hidden, num_ensemble)

    packed = pack_params(params)                       # one-time packing (bf16 weights)
    out = jax.block_until_ready(qu_ensemble_forward(obs, act, packed))

    ref = _reference_forward(obs, act, params)
    assert out.shape == (2, B, num_ensemble), out.shape
    # bf16 weights/inputs with f32 accumulation: loosened tolerance per review
    # (kept the check rather than dropping it).
    max_err = float(jnp.max(jnp.abs(out - ref)))
    assert jnp.allclose(out, ref, atol=5e-2, rtol=5e-2), max_err

    print("KERNEL_OK")
</pallas_src>

<mosaic_0001>
module attributes {stable_mosaic.version = 11 : i64} {
  func.func @_qu_ensemble_kernel(%arg0: i32, %arg1: memref<8x16xbf16, #tpu.memory_space<vmem>>, %arg2: memref<16x128xbf16, #tpu.memory_space<vmem>>, %arg3: memref<1x128xf32, #tpu.memory_space<vmem>>, %arg4: memref<128x128xbf16, #tpu.memory_space<vmem>>, %arg5: memref<1x128xf32, #tpu.memory_space<vmem>>, %arg6: memref<128x8xbf16, #tpu.memory_space<vmem>>, %arg7: memref<1x8xf32, #tpu.memory_space<vmem>>, %arg8: memref<8x8xf32, #tpu.memory_space<vmem>>) attributes {dimension_semantics = [#tpu.dimension_semantics<parallel>], iteration_bounds = array<i64: 1>, scalar_prefetch = 0 : i64, scratch_operands = 0 : i64, tpu.core_type = #tpu.core_type<tc>, window_params = [{transform_indices = @transform_0, window_bounds = array<i64: 8, 16>}, {pipeline_mode = #tpu.pipeline_mode<synchronous>, transform_indices = @transform_1, window_bounds = array<i64: 16, 128>}, {pipeline_mode = #tpu.pipeline_mode<synchronous>, transform_indices = @transform_2, window_bounds = array<i64: 1, 128>}, {pipeline_mode = #tpu.pipeline_mode<synchronous>, transform_indices = @transform_3, window_bounds = array<i64: 128, 128>}, {pipeline_mode = #tpu.pipeline_mode<synchronous>, transform_indices = @transform_4, window_bounds = array<i64: 1, 128>}, {pipeline_mode = #tpu.pipeline_mode<synchronous>, transform_indices = @transform_5, window_bounds = array<i64: 128, 8>}, {pipeline_mode = #tpu.pipeline_mode<synchronous>, transform_indices = @transform_6, window_bounds = array<i64: 1, 8>}, {transform_indices = @transform_7, window_bounds = array<i64: 8, 8>}]} {
    %c0 = arith.constant 0 : index
    %c0_0 = arith.constant 0 : index
    %0 = vector.load %arg1[%c0, %c0_0] : memref<8x16xbf16, #tpu.memory_space<vmem>>, vector<8x16xbf16>
    %c0_1 = arith.constant 0 : index
    %c0_2 = arith.constant 0 : index
    %1 = vector.load %arg2[%c0_1, %c0_2] : memref<16x128xbf16, #tpu.memory_space<vmem>>, vector<16x128xbf16>
    %cst = arith.constant dense<0.000000e+00> : vector<8x128xf32>
    %2 = tpu.matmul %0, %1, %cst {dimension_numbers = #tpu.dot_dimension_numbers<[1], [0], [0], [1], [0, 0, 1, 1], [], []>} : vector<8x16xbf16>, vector<16x128xbf16>, vector<8x128xf32> -> vector<8x128xf32>
    %c0_3 = arith.constant 0 : index
    %c0_4 = arith.constant 0 : index
    %3 = vector.load %arg3[%c0_3, %c0_4] : memref<1x128xf32, #tpu.memory_space<vmem>>, vector<1x128xf32>
    %4 = vector.broadcast %3 : vector<1x128xf32> to vector<8x128xf32>
    %5 = arith.addf %2, %4 : vector<8x128xf32>
    %cst_5 = arith.constant 0.000000e+00 : f32
    %6 = vector.broadcast %cst_5 : f32 to vector<8x128xf32>
    %7 = arith.maximumf %5, %6 : vector<8x128xf32>
    %8 = arith.truncf %7 : vector<8x128xf32> to vector<8x128xbf16>
    %c0_6 = arith.constant 0 : index
    %c0_7 = arith.constant 0 : index
    %9 = vector.load %arg4[%c0_6, %c0_7] : memref<128x128xbf16, #tpu.memory_space<vmem>>, vector<128x128xbf16>
    %cst_8 = arith.constant dense<0.000000e+00> : vector<8x128xf32>
    %10 = tpu.matmul %8, %9, %cst_8 {dimension_numbers = #tpu.dot_dimension_numbers<[1], [0], [0], [1], [0, 0, 1, 1], [], []>} : vector<8x128xbf16>, vector<128x128xbf16>, vector<8x128xf32> -> vector<8x128xf32>
    %c0_9 = arith.constant 0 : index
    %c0_10 = arith.constant 0 : index
    %11 = vector.load %arg5[%c0_9, %c0_10] : memref<1x128xf32, #tpu.memory_space<vmem>>, vector<1x128xf32>
    %12 = vector.broadcast %11 : vector<1x128xf32> to vector<8x128xf32>
    %13 = arith.addf %10, %12 : vector<8x128xf32>
    %cst_11 = arith.constant 0.000000e+00 : f32
    %14 = vector.broadcast %cst_11 : f32 to vector<8x128xf32>
    %15 = arith.maximumf %13, %14 : vector<8x128xf32>
    %16 = arith.truncf %15 : vector<8x128xf32> to vector<8x128xbf16>
    %c0_12 = arith.constant 0 : index
    %c0_13 = arith.constant 0 : index
    %17 = vector.load %arg6[%c0_12, %c0_13] : memref<128x8xbf16, #tpu.memory_space<vmem>>, vector<128x8xbf16>
    %cst_14 = arith.constant dense<0.000000e+00> : vector<8x8xf32>
    %18 = tpu.matmul %16, %17, %cst_14 {dimension_numbers = #tpu.dot_dimension_numbers<[1], [0], [0], [1], [0, 0, 1, 1], [], []>} : vector<8x128xbf16>, vector<128x8xbf16>, vector<8x8xf32> -> vector<8x8xf32>
    %c0_15 = arith.constant 0 : index
    %c0_16 = arith.constant 0 : index
    %19 = vector.load %arg7[%c0_15, %c0_16] : memref<1x8xf32, #tpu.memory_space<vmem>>, vector<1x8xf32>
    %20 = vector.broadcast %19 : vector<1x8xf32> to vector<8x8xf32>
    %21 = arith.addf %18, %20 : vector<8x8xf32>
    %c0_17 = arith.constant 0 : index
    %c0_18 = arith.constant 0 : index
    %22 = vector.load %arg8[%c0_17, %c0_18] : memref<8x8xf32, #tpu.memory_space<vmem>>, vector<8x8xf32>
    tpu.vector_store %arg8[%c0_17, %c0_18], %21 {strides = array<i32>} : memref<8x8xf32, #tpu.memory_space<vmem>>, vector<8x8xf32>,
    return
  }
  func.func @transform_0(%arg0: i32) -> (i32, i32) {
    %c0_i32 = arith.constant 0 : i32
    %c0_i32_0 = arith.constant 0 : i32
    return %arg0, %c0_i32 : i32, i32
  }
  func.func @transform_1(%arg0: i32) -> (i32, i32) {
    %c0_i32 = arith.constant 0 : i32
    %c0_i32_0 = arith.constant 0 : i32
    %c0_i32_1 = arith.constant 0 : i32
    return %c0_i32, %c0_i32_0 : i32, i32
  }
  func.func @transform_2(%arg0: i32) -> (i32, i32) {
    %c0_i32 = arith.constant 0 : i32
    %c0_i32_0 = arith.constant 0 : i32
    %c0_i32_1 = arith.constant 0 : i32
    return %c0_i32, %c0_i32_0 : i32, i32
  }
  func.func @transform_3(%arg0: i32) -> (i32, i32) {
    %c0_i32 = arith.constant 0 : i32
    %c0_i32_0 = arith.constant 0 : i32
    %c0_i32_1 = arith.constant 0 : i32
    return %c0_i32, %c0_i32_0 : i32, i32
  }
  func.func @transform_4(%arg0: i32) -> (i32, i32) {
    %c0_i32 = arith.constant 0 : i32
    %c0_i32_0 = arith.constant 0 : i32
    %c0_i32_1 = arith.constant 0 : i32
    return %c0_i32, %c0_i32_0 : i32, i32
  }
  func.func @transform_5(%arg0: i32) -> (i32, i32) {
    %c0_i32 = arith.constant 0 : i32
    %c0_i32_0 = arith.constant 0 : i32
    %c0_i32_1 = arith.constant 0 : i32
    return %c0_i32, %c0_i32_0 : i32, i32
  }
  func.func @transform_6(%arg0: i32) -> (i32, i32) {
    %c0_i32 = arith.constant 0 : i32
    %c0_i32_0 = arith.constant 0 : i32
    %c0_i32_1 = arith.constant 0 : i32
    return %c0_i32, %c0_i32_0 : i32, i32
  }
  func.func @transform_7(%arg0: i32) -> (i32, i32) {
    %c0_i32 = arith.constant 0 : i32
    %c0_i32_0 = arith.constant 0 : i32
    return %arg0, %c0_i32 : i32, i32
  }
}

</mosaic_0001>

<llo_original>
// kernel: _forward_impl.1
$region0: #{_forward_impl.1}
  #allocation0 [shape = 'u32[]', space=smem, size = 0x4, offset = 0x4, fixed_abs, tag = 'smem constant byte address 0x4 - core index']
  #allocation1 [shape = 'u32[144,128]{1,0:T(1,128)}', space=vmem, size = 0x12000, scoped, tag = 'internal scratch']
  %s0 = inlined_call_operand.vmem [shape: bf16[8,16], index: 0, kind: input, shape index: {}]
  %s1 = inlined_call_operand.vmem [shape: bf16[16,128], index: 1, kind: input, shape index: {}]
  %s2 = inlined_call_operand.vmem [shape: f32[1,128], index: 2, kind: input, shape index: {}]
  %s3 = inlined_call_operand.vmem [shape: bf16[128,128], index: 3, kind: input, shape index: {}]
  %s4 = inlined_call_operand.vmem [shape: f32[1,128], index: 4, kind: input, shape index: {}]
  %s5 = inlined_call_operand.vmem [shape: bf16[128,8], index: 5, kind: input, shape index: {}]
  %s6 = inlined_call_operand.vmem [shape: f32[1,8], index: 6, kind: input, shape index: {}]
  %s7 = inlined_call_operand.vmem [shape: f32[8,8], index: 7, kind: output, shape index: {}]
  %s8 = sld [smem:[#allocation0]]
  $region38: #{_forward_impl.1} parent=0
    _
  %s10 = ssub.s32 1, %s8
  %s11 = scalar_select 0, %s10, %s8
  // Predicated region
  $region2: #{_forward_impl.1} parent=0 // pred_check
    _
  $region3: #{_forward_impl.1} parent=0 // pred_check_branch
    %13 = sbr.rel (0) target = $region5
  $region4: #{_forward_impl.1} parent=0 // pred_region
    _
  $region5: #{_forward_impl.1} parent=0 // pred_fallthru
    _
  // Predicated region
  $region6: #{_forward_impl.1} parent=0 // pred_check
    _
  $region7: #{_forward_impl.1} parent=0 // pred_check_branch
    %15 = sbr.rel (0) target = $region9
  $region8: #{_forward_impl.1} parent=0 // pred_region
    _
  $region9: #{_forward_impl.1} parent=0 // pred_fallthru
    _
  // Predicated region
  $region10: #{_forward_impl.1} parent=0 // pred_check
    _
  $region11: #{_forward_impl.1} parent=0 // pred_check_branch
    %17 = sbr.rel (0) target = $region13
  $region12: #{_forward_impl.1} parent=0 // pred_region
    _
  $region13: #{_forward_impl.1} parent=0 // pred_fallthru
    _
  // Predicated region
  $region14: #{_forward_impl.1} parent=0 // pred_check
    _
  $region15: #{_forward_impl.1} parent=0 // pred_check_branch
    %19 = sbr.rel (0) target = $region17
  $region16: #{_forward_impl.1} parent=0 // pred_region
    _
  $region17: #{_forward_impl.1} parent=0 // pred_fallthru
    _
  // Predicated region
  $region18: #{_forward_impl.1} parent=0 // pred_check
    _
  $region19: #{_forward_impl.1} parent=0 // pred_check_branch
    %21 = sbr.rel (0) target = $region21
  $region20: #{_forward_impl.1} parent=0 // pred_region
    _
  $region21: #{_forward_impl.1} parent=0 // pred_fallthru
    _
  // Predicated region
  $region22: #{_forward_impl.1} parent=0 // pred_check
    _
  $region23: #{_forward_impl.1} parent=0 // pred_check_branch
    %23 = sbr.rel (0) target = $region25
  $region24: #{_forward_impl.1} parent=0 // pred_region
    _
  $region25: #{_forward_impl.1} parent=0 // pred_fallthru
    _
  // Predicated region
  $region26: #{_forward_impl.1} parent=0 // pred_check
    _
  $region27: #{_forward_impl.1} parent=0 // pred_check_branch
    %25 = sbr.rel (0) target = $region29
  $region28: #{_forward_impl.1} parent=0 // pred_region
    _
  $region29: #{_forward_impl.1} parent=0 // pred_fallthru
    _
  %v27 = vld [vmem:[%s0] sm:$0xf]
  %v28 = vld [vmem:[%s1] sm:$0xf]
  %v29 = vld [vmem:[%s1 + $0x4] sm:$0xf]
  %v30 = vld [vmem:[%s2] sm:$0x1]
  %v32 = vlaneseq
  %v33 = vshrl.u32 %v32, 7
  %v34 = vsub.s32 0, %v33
  %v35 = vrot.slane %v30, %v34
  %v39 = vunpack.c.l.b16 %v28
  %v40 = vunpack.c.l.b16 %v29
  %v41 = vpack.c.b16 %v40, %v39
  %vm43 = vcmask 130048
  %v45 = vsel %vm43, %v27, 0
  %47 = vmatprep.subr.bf16.mxu0 0
  %48 = vmatpush1.bf16.msra.mxu0 %v41
  %49 = vmatprep.subr.bf16.mxu0 0
  %50 = vmatpush1.bf16.msra.mxu0 0
  %51 = vmatprep.subr.bf16.mxu0 0
  %52 = vmatpush1.bf16.msra.mxu0 0
  %53 = vmatprep.subr.bf16.mxu0 0
  %54 = vmatpush1.bf16.msra.mxu0 0
  %55 = vmatprep.subr.bf16.mxu0 0
  %56 = vmatpush1.bf16.msra.mxu0 0
  %57 = vmatprep.subr.bf16.mxu0 0
  %58 = vmatpush1.bf16.msra.mxu0 0
  %59 = vmatprep.subr.bf16.mxu0 0
  %60 = vmatpush1.bf16.msra.mxu0 0
  %61 = vmatprep.subr.bf16.mxu0 0
  %62 = vmatpush1.bf16.msra.mxu0 0
  %63 = vmatprep.subr.bf16.mxu0 0
  %64 = vmatpush1.bf16.msra.mxu0 0
  %65 = vmatprep.subr.bf16.mxu0 0
  %66 = vmatpush1.bf16.msra.mxu0 0
  %67 = vmatprep.subr.bf16.mxu0 0
  %68 = vmatpush1.bf16.msra.mxu0 0
  %69 = vmatprep.subr.bf16.mxu0 0
  %70 = vmatpush1.bf16.msra.mxu0 0
  %71 = vmatprep.subr.bf16.mxu0 0
  %72 = vmatpush1.bf16.msra.mxu0 0
  %73 = vmatprep.subr.bf16.mxu0 0
  %74 = vmatpush1.bf16.msra.mxu0 0
  %75 = vmatprep.subr.bf16.mxu0 0
  %76 = vmatpush1.bf16.msra.mxu0 0
  %77 = vmatprep.subr.bf16.mxu0 0
  %78 = vmatpush1.bf16.msra.mxu0 0
  %79 = vmatprep.mubr.bf16.mxu0 0
  %80 = vmatmul.mubr.bf16.gmra.mrb[0].mxu0 %v45
  %v81 = vpop.f32.mrb[0].mxu0
  %v82 = vadd.f32 %v35, %v81
  %v83 = vpop.f32.mrb[0].mxu0
  %v84 = vpop.f32.mrb[0].mxu0
  %v85 = vpop.f32.mrb[0].mxu0
  %86 = vdwg.mxu0
  %v87 = vmax.f32 %v82, 0.0
  %v88 = vpack.c.bf16 %v87, %v87
  %v89 = vld [vmem:[%s3] sm:$0xf]
  %v90 = vld [vmem:[%s3 + $0x4] sm:$0xf]
  %v91 = vld [vmem:[%s3 + $0x8] sm:$0xf]
  %v92 = vld [vmem:[%s3 + $0xc] sm:$0xf]
  %v93 = vld [vmem:[%s3 + $0x10] sm:$0xf]
  %v94 = vld [vmem:[%s3 + $0x14] sm:$0xf]
  %v95 = vld [vmem:[%s3 + $0x18] sm:$0xf]
  %v96 = vld [vmem:[%s3 + $0x1c] sm:$0xf]
  %v97 = vld [vmem:[%s3 + $0x20] sm:$0xf]
  %v98 = vld [vmem:[%s3 + $0x24] sm:$0xf]
  %v99 = vld [vmem:[%s3 + $0x28] sm:$0xf]
  %v100 = vld [vmem:[%s3 + $0x2c] sm:$0xf]
  %v101 = vld [vmem:[%s3 + $0x30] sm:$0xf]
  %v102 = vld [vmem:[%s3 + $0x34] sm:$0xf]
  %v103 = vld [vmem:[%s3 + $0x38] sm:$0xf]
  %v104 = vld [vmem:[%s3 + $0x3c] sm:$0xf]
  %v105 = vld [vmem:[%s4] sm:$0x1]
  %v107 = vlaneseq
  %v108 = vshrl.u32 %v107, 7
  %v109 = vsub.s32 0, %v108
  %v110 = vrot.slane %v105, %v109
  %v128 = vunpack.c.l.b16 %v89
  %v129 = vunpack.c.l.b16 %v90
  %v130 = vunpack.c.l.b16 %v91
  %v131 = vunpack.c.l.b16 %v92
  %v132 = vunpack.c.l.b16 %v93
  %v133 = vunpack.c.l.b16 %v94
  %v134 = vunpack.c.l.b16 %v95
  %v135 = vunpack.c.l.b16 %v96
  %v136 = vunpack.c.l.b16 %v97
  %v137 = vunpack.c.l.b16 %v98
  %v138 = vunpack.c.l.b16 %v99
  %v139 = vunpack.c.l.b16 %v100
  %v140 = vunpack.c.l.b16 %v101
  %v141 = vunpack.c.l.b16 %v102
  %v142 = vunpack.c.l.b16 %v103
  %v143 = vunpack.c.l.b16 %v104
  %v144 = vpack.c.b16 %v129, %v128
  %v145 = vpack.c.b16 %v131, %v130
  %v146 = vpack.c.b16 %v133, %v132
  %v147 = vpack.c.b16 %v135, %v134
  %v148 = vpack.c.b16 %v137, %v136
  %v149 = vpack.c.b16 %v139, %v138
  %v150 = vpack.c.b16 %v141, %v140
  %v151 = vpack.c.b16 %v143, %v142
  %160 = vmatprep.subr.bf16.mxu0 0
  %161 = vmatpush1.bf16.msra.mxu0 %v144
  %162 = vmatprep.subr.bf16.mxu0 0
  %163 = vmatpush1.bf16.msra.mxu0 %v145
  %164 = vmatprep.subr.bf16.mxu0 0
  %165 = vmatpush1.bf16.msra.mxu0 %v146
  %166 = vmatprep.subr.bf16.mxu0 0
  %167 = vmatpush1.bf16.msra.mxu0 %v147
  %168 = vmatprep.subr.bf16.mxu0 0
  %169 = vmatpush1.bf16.msra.mxu0 %v148
  %170 = vmatprep.subr.bf16.mxu0 0
  %171 = vmatpush1.bf16.msra.mxu0 %v149
  %172 = vmatprep.subr.bf16.mxu0 0
  %173 = vmatpush1.bf16.msra.mxu0 %v150
  %174 = vmatprep.subr.bf16.mxu0 0
  %175 = vmatpush1.bf16.msra.mxu0 %v151
  %176 = vmatprep.subr.bf16.mxu0 0
  %177 = vmatpush1.bf16.msra.mxu0 0
  %178 = vmatprep.subr.bf16.mxu0 0
  %179 = vmatpush1.bf16.msra.mxu0 0
  %180 = vmatprep.subr.bf16.mxu0 0
  %181 = vmatpush1.bf16.msra.mxu0 0
  %182 = vmatprep.subr.bf16.mxu0 0
  %183 = vmatpush1.bf16.msra.mxu0 0
  %184 = vmatprep.subr.bf16.mxu0 0
  %185 = vmatpush1.bf16.msra.mxu0 0
  %186 = vmatprep.subr.bf16.mxu0 0
  %187 = vmatpush1.bf16.msra.mxu0 0
  %188 = vmatprep.subr.bf16.mxu0 0
  %189 = vmatpush1.bf16.msra.mxu0 0
  %190 = vmatprep.subr.bf16.mxu0 0
  %191 = vmatpush1.bf16.msra.mxu0 0
  %192 = vmatprep.mubr.bf16.mxu0 0
  %193 = vmatmul.mubr.bf16.gmra.mrb[0].mxu0 %v88
  %v194 = vpop.f32.mrb[0].mxu0
  %v195 = vadd.f32 %v110, %v194
  %v196 = vpop.f32.mrb[0].mxu0
  %v197 = vpop.f32.mrb[0].mxu0
  %v198 = vpop.f32.mrb[0].mxu0
  %199 = vdwg.mxu0
  %v200 = vmax.f32 %v195, 0.0
  %v201 = vpack.c.bf16 %v200, %v200
  %v202 = vld [vmem:[%s5] sm:$0xf]
  %v203 = vld [vmem:[%s5 + $0x4] sm:$0xf]
  %v204 = vld [vmem:[%s5 + $0x8] sm:$0xf]
  %v205 = vld [vmem:[%s5 + $0xc] sm:$0xf]
  %v206 = vld [vmem:[%s5 + $0x10] sm:$0xf]
  %v207 = vld [vmem:[%s5 + $0x14] sm:$0xf]
  %v208 = vld [vmem:[%s5 + $0x18] sm:$0xf]
  %v209 = vld [vmem:[%s5 + $0x1c] sm:$0xf]
  %v210 = vld [vmem:[%s5 + $0x20] sm:$0xf]
  %v211 = vld [vmem:[%s5 + $0x24] sm:$0xf]
  %v212 = vld [vmem:[%s5 + $0x28] sm:$0xf]
  %v213 = vld [vmem:[%s5 + $0x2c] sm:$0xf]
  %v214 = vld [vmem:[%s5 + $0x30] sm:$0xf]
  %v215 = vld [vmem:[%s5 + $0x34] sm:$0xf]
  %v216 = vld [vmem:[%s5 + $0x38] sm:$0xf]
  %v217 = vld [vmem:[%s5 + $0x3c] sm:$0xf]
  %v218 = vld [vmem:[%s6] sm:$0x1]
  %v220 = vlaneseq
  %v221 = vshrl.u32 %v220, 7
  %v222 = vsub.s32 0, %v221
  %v223 = vrot.slane %v218, %v222
  %v241 = vunpack.c.l.b16 %v202
  %v242 = vunpack.c.l.b16 %v203
  %v243 = vunpack.c.l.b16 %v204
  %v244 = vunpack.c.l.b16 %v205
  %v245 = vunpack.c.l.b16 %v206
  %v246 = vunpack.c.l.b16 %v207
  %v247 = vunpack.c.l.b16 %v208
  %v248 = vunpack.c.l.b16 %v209
  %v249 = vunpack.c.l.b16 %v210
  %v250 = vunpack.c.l.b16 %v211
  %v251 = vunpack.c.l.b16 %v212
  %v252 = vunpack.c.l.b16 %v213
  %v253 = vunpack.c.l.b16 %v214
  %v254 = vunpack.c.l.b16 %v215
  %v255 = vunpack.c.l.b16 %v216
  %v256 = vunpack.c.l.b16 %v217
  %v257 = vpack.c.b16 %v242, %v241
  %v258 = vpack.c.b16 %v244, %v243
  %v259 = vpack.c.b16 %v246, %v245
  %v260 = vpack.c.b16 %v248, %v247
  %v261 = vpack.c.b16 %v250, %v249
  %v262 = vpack.c.b16 %v252, %v251
  %v263 = vpack.c.b16 %v254, %v253
  %v264 = vpack.c.b16 %v256, %v255
  %273 = vmatprep.subr.bf16.mxu0 0
  %274 = vmatpush1.bf16.msra.mxu0 %v257
  %275 = vmatprep.subr.bf16.mxu0 0
  %276 = vmatpush1.bf16.msra.mxu0 %v258
  %277 = vmatprep.subr.bf16.mxu0 0
  %278 = vmatpush1.bf16.msra.mxu0 %v259
  %279 = vmatprep.subr.bf16.mxu0 0
  %280 = vmatpush1.bf16.msra.mxu0 %v260
  %281 = vmatprep.subr.bf16.mxu0 0
  %282 = vmatpush1.bf16.msra.mxu0 %v261
  %283 = vmatprep.subr.bf16.mxu0 0
  %284 = vmatpush1.bf16.msra.mxu0 %v262
  %285 = vmatprep.subr.bf16.mxu0 0
  %286 = vmatpush1.bf16.msra.mxu0 %v263
  %287 = vmatprep.subr.bf16.mxu0 0
  %288 = vmatpush1.bf16.msra.mxu0 %v264
  %289 = vmatprep.subr.bf16.mxu0 0
  %290 = vmatpush1.bf16.msra.mxu0 0
  %291 = vmatprep.subr.bf16.mxu0 0
  %292 = vmatpush1.bf16.msra.mxu0 0
  %293 = vmatprep.subr.bf16.mxu0 0
  %294 = vmatpush1.bf16.msra.mxu0 0
  %295 = vmatprep.subr.bf16.mxu0 0
  %296 = vmatpush1.bf16.msra.mxu0 0
  %297 = vmatprep.subr.bf16.mxu0 0
  %298 = vmatpush1.bf16.msra.mxu0 0
  %299 = vmatprep.subr.bf16.mxu0 0
  %300 = vmatpush1.bf16.msra.mxu0 0
  %301 = vmatprep.subr.bf16.mxu0 0
  %302 = vmatpush1.bf16.msra.mxu0 0
  %303 = vmatprep.subr.bf16.mxu0 0
  %304 = vmatpush1.bf16.msra.mxu0 0
  %305 = vmatprep.mubr.bf16.mxu0 0
  %306 = vmatmul.mubr.bf16.gmra.mrb[0].mxu0 %v201
  %v307 = vpop.f32.mrb[0].mxu0
  %v308 = vadd.f32 %v223, %v307
  %v309 = vpop.f32.mrb[0].mxu0
  %v310 = vpop.f32.mrb[0].mxu0
  %v311 = vpop.f32.mrb[0].mxu0
  %312 = vdwg.mxu0
  %vm313 = vcmask 64512
  %314 = vst.msk [vmem:[%s7] sm:$0xff] %vm313, %v308
  // Predicated region
  $region30: #{_forward_impl.1} parent=0 // pred_check
    _
  $region31: #{_forward_impl.1} parent=0 // pred_check_branch
    %316 = sbr.rel (0) target = $region33
  $region32: #{_forward_impl.1} parent=0 // pred_region
    _
  $region33: #{_forward_impl.1} parent=0 // pred_fallthru
    _
  // Predicated region
  $region34: #{_forward_impl.1} parent=0 // pred_check
    _
  $region35: #{_forward_impl.1} parent=0 // pred_check_branch
    %318 = sbr.rel (0) target = $region37
  $region36: #{_forward_impl.1} parent=0 // pred_region
    _
  $region37: #{_forward_impl.1} parent=0 // pred_fallthru
    _

</llo_original>
